<compile_context>
chip_gen: v7x
topology: tpu7x:2x2x1
jax: 0.10.0
libtpu: 0.0.40
codegen_flags: <defaults>
</compile_context>

<pallas_src>
import jax
import jax.numpy as jnp
from jax import lax
from jax.experimental import pallas as pl
from jax.experimental.pallas import tpu as pltpu

HIDDEN = 16
EPS = 1e-5

MAX_LANES = 1024       # preferred lane-dense last dim (multiple of 128)
MAX_BLOCK_ROWS = 512   # 512 * 1024 * 4 B = 2 MiB f32 per block
STRIP_ROWS = 8         # strip-mined inner rows: <= ~48 live vregs per strip
N_PARTIAL = 4          # independent partial accumulators (breaks add chain)

assert HIDDEN % N_PARTIAL == 0 and N_PARTIAL == 4


def _make_kernel(strip_rows, n_strips):
    """Build the kernel for a given (static) strip decomposition of the block."""

    def density_kernel(scale_ref, shift_ref, w2n_ref, b2n_ref, x_ref, o_ref):
        # Hoist all SMEM scalar reads out of the strip loop (scalar slots are idle).
        scale = [scale_ref[c] for c in range(HIDDEN)]
        shift = [shift_ref[c] for c in range(HIDDEN)]
        w2n = [w2n_ref[c] for c in range(HIDDEN)]
        b2n = b2n_ref[0]

        def compute(x):
            # conv1 + folded BN + ReLU + (negated) conv2 accumulation, statically
            # unrolled over 16 hidden channels with 4 independent partial accs.
            accs = []
            for p in range(N_PARTIAL):
                h = jnp.maximum(scale[p] * x + shift[p], 0.0)
                accs.append(w2n[p] * h)
            for c in range(N_PARTIAL, HIDDEN):
                p = c % N_PARTIAL
                h = jnp.maximum(scale[c] * x + shift[c], 0.0)
                accs[p] = accs[p] + w2n[c] * h
            z_neg = ((accs[0] + accs[1]) + (accs[2] + accs[3])) + b2n
            # sigmoid(z) = 1 / (1 + exp(-z)); -z accumulated directly, exp and
            # approx reciprocal both land on the (otherwise idle) EUP slot.
            return pl.reciprocal(1.0 + jnp.exp(z_neg), approx=True)

        if n_strips == 1:
            o_ref[...] = compute(x_ref[...]).astype(o_ref.dtype)
        else:
            def body(s, carry):
                r0 = pl.multiple_of(s * strip_rows, strip_rows)
                o_ref[pl.ds(r0, strip_rows), :] = compute(
                    x_ref[pl.ds(r0, strip_rows), :]
                ).astype(o_ref.dtype)
                return carry

            lax.fori_loop(0, n_strips, body, 0)

    return density_kernel


def _fold_bn(params):
    """Fold eval-mode BatchNorm into conv1 and the sigmoid negation into conv2."""
    w1, b1, gamma, beta, run_mean, run_var, w2, b2 = params
    inv_std = gamma / jnp.sqrt(run_var + EPS)          # (16,)
    scale = inv_std * w1                               # (16,)
    shift = (b1 - run_mean) * inv_std + beta           # (16,)
    w2n = -w2                                          # (16,)  accumulate -z
    b2n = -jnp.reshape(b2, (1,))                       # (1,)
    return scale, shift, w2n, b2n


def _round_up(v, m):
    return ((v + m - 1) // m) * m


def density_net_pallas(x, params):
    """x: (B, 1, K, N) float32 -> (B, 1, K, N) float32 (eval-mode BatchNorm)."""
    scale, shift, w2n, b2n = _fold_bn(params)

    B, C, K, N = x.shape
    assert C == 1
    total = B * K * N
    dtype = x.dtype

    # ---- lane width: no-pad fast path whenever a {1024,512,256,128} divisor
    # exists; otherwise pad the flat array up to a multiple of 128.
    lanes = None
    for cand in (MAX_LANES, 512, 256, 128):
        if total % cand == 0:
            lanes = cand
            break
    if lanes is None:
        lanes = 128
        padded_total = _round_up(total, lanes)
    else:
        padded_total = total
    rows = padded_total // lanes

    # ---- block rows: >=2 blocks (v7x dual-TC load balance) when possible,
    # capped at ~2 MiB f32 per block; Pallas handles the ragged last block.
    if rows <= 8:
        block_rows = rows                              # full-dim block
    else:
        half = -(-rows // 2)
        block_rows = min(MAX_BLOCK_ROWS, _round_up(half, 8))
    n_blocks = -(-rows // block_rows)

    strip_rows = STRIP_ROWS if block_rows % STRIP_ROWS == 0 else block_rows
    n_strips = block_rows // strip_rows

    # ---- lane-dense 2D flatten (free reshape on the fast path).
    xf = x.reshape(-1)
    if padded_total != total:
        xf = jnp.pad(xf, (0, padded_total - total))
    x2 = xf.reshape(rows, lanes)

    kernel = _make_kernel(strip_rows, n_strips)
    smem_spec = pl.BlockSpec(memory_space=pltpu.MemorySpace.SMEM)
    out2 = pl.pallas_call(
        kernel,
        out_shape=jax.ShapeDtypeStruct((rows, lanes), dtype),
        grid=(n_blocks,),
        in_specs=[
            smem_spec,  # scale (16,)
            smem_spec,  # shift (16,)
            smem_spec,  # -w2   (16,)
            smem_spec,  # -b2   (1,)
            pl.BlockSpec((block_rows, lanes), lambda i: (i, 0)),
        ],
        out_specs=pl.BlockSpec((block_rows, lanes), lambda i: (i, 0)),
        compiler_params=pltpu.CompilerParams(
            dimension_semantics=("parallel",),   # shards blocks across v7x's 2 TCs
            vmem_limit_bytes=32 * 1024 * 1024,   # 2 bufs x (in+out) x 2 MiB << 32 MiB
        ),
    )(scale, shift, w2n, b2n, x2)

    # Restore B x 1 x K x N (slice only on the padded fallback path).
    out = out2.reshape(-1)
    if padded_total != total:
        out = out[:total]
    return out.reshape(B, 1, K, N)


def density_net_ref(x, params):
    """Pure-JAX reference of the forward pass (eval-mode BatchNorm)."""
    w1, b1, gamma, beta, run_mean, run_var, w2, b2 = params
    inv_std = gamma / jnp.sqrt(run_var + EPS)
    scale = inv_std * w1
    shift = (b1 - run_mean) * inv_std + beta
    h = jnp.maximum(scale[None, :, None, None] * x + shift[None, :, None, None], 0.0)
    y = jnp.sum(w2[None, :, None, None] * h, axis=1, keepdims=True) + b2
    return jax.nn.sigmoid(y)


def init_params(key):
    """Deterministic synthetic parameters matching DensityNet.__init__ shapes."""
    k1, k2, k3, k4, k5, k6 = jax.random.split(key, 6)
    w1 = jax.random.normal(k1, (HIDDEN,), jnp.float32) * 0.5   # conv1 weight (16,1,1,1) squeezed
    b1 = jax.random.normal(k2, (HIDDEN,), jnp.float32) * 0.1   # conv1 bias
    gamma = 1.0 + 0.1 * jax.random.normal(k3, (HIDDEN,), jnp.float32)             # bn1 weight
    beta = 0.1 * jax.random.normal(k4, (HIDDEN,), jnp.float32)                    # bn1 bias
    run_mean = 0.05 * jax.random.normal(k5, (HIDDEN,), jnp.float32)               # bn1 running_mean
    run_var = jnp.abs(1.0 + 0.1 * jax.random.normal(k6, (HIDDEN,), jnp.float32))  # bn1 running_var
    w2 = jax.random.normal(jax.random.fold_in(key, 7), (HIDDEN,), jnp.float32) * 0.3  # conv2 weight
    b2 = jnp.float32(0.05)                                                         # conv2 bias
    return (w1, b1, gamma, beta, run_mean, run_var, w2, b2)


if __name__ == "__main__":
    key = jax.random.PRNGKey(0)
    kx, kp = jax.random.split(key)

    # density input: B x 1 x K x N (K = neighbors, N = points) — small but big
    # enough to exercise the no-pad fast path, the 2-block grid and the
    # strip-mined inner loop (rows=32 -> 2 blocks x 2 strips).
    B, K, N = 2, 32, 512
    x = jnp.abs(jax.random.normal(kx, (B, 1, K, N), jnp.float32))

    params = init_params(kp)

    out = density_net_pallas(x, params)
    out = jax.block_until_ready(out)

    ref = density_net_ref(x, params)
    assert out.shape == (B, 1, K, N)
    # Tolerance accounts for the EUP approx-reciprocal in the sigmoid epilogue.
    assert jnp.allclose(out, ref, atol=3e-3, rtol=3e-3), "mismatch vs reference"

    print("KERNEL_OK")
</pallas_src>

<mosaic_0001>
module attributes {stable_mosaic.version = 11 : i64} {
  func.func @density_kernel(%arg0: i32, %arg1: memref<16xf32, #tpu.memory_space<smem>>, %arg2: memref<16xf32, #tpu.memory_space<smem>>, %arg3: memref<16xf32, #tpu.memory_space<smem>>, %arg4: memref<1xf32, #tpu.memory_space<smem>>, %arg5: memref<16x1024xf32, #tpu.memory_space<vmem>>, %arg6: memref<16x1024xf32, #tpu.memory_space<vmem>>) attributes {dimension_semantics = [#tpu.dimension_semantics<parallel>], iteration_bounds = array<i64: 2>, scalar_prefetch = 0 : i64, scratch_operands = 0 : i64, tpu.core_type = #tpu.core_type<tc>, window_params = [{transform_indices = @transform_0, window_bounds = array<i64: 16>}, {transform_indices = @transform_1, window_bounds = array<i64: 16>}, {transform_indices = @transform_2, window_bounds = array<i64: 16>}, {transform_indices = @transform_3, window_bounds = array<i64: 1>}, {transform_indices = @transform_4, window_bounds = array<i64: 16, 1024>}, {transform_indices = @transform_5, window_bounds = array<i64: 16, 1024>}]} {
    %c0 = arith.constant 0 : index
    %0 = memref.load %arg1[%c0] : memref<16xf32, #tpu.memory_space<smem>>
    %c1 = arith.constant 1 : index
    %1 = memref.load %arg1[%c1] : memref<16xf32, #tpu.memory_space<smem>>
    %c2 = arith.constant 2 : index
    %2 = memref.load %arg1[%c2] : memref<16xf32, #tpu.memory_space<smem>>
    %c3 = arith.constant 3 : index
    %3 = memref.load %arg1[%c3] : memref<16xf32, #tpu.memory_space<smem>>
    %c4 = arith.constant 4 : index
    %4 = memref.load %arg1[%c4] : memref<16xf32, #tpu.memory_space<smem>>
    %c5 = arith.constant 5 : index
    %5 = memref.load %arg1[%c5] : memref<16xf32, #tpu.memory_space<smem>>
    %c6 = arith.constant 6 : index
    %6 = memref.load %arg1[%c6] : memref<16xf32, #tpu.memory_space<smem>>
    %c7 = arith.constant 7 : index
    %7 = memref.load %arg1[%c7] : memref<16xf32, #tpu.memory_space<smem>>
    %c8 = arith.constant 8 : index
    %8 = memref.load %arg1[%c8] : memref<16xf32, #tpu.memory_space<smem>>
    %c9 = arith.constant 9 : index
    %9 = memref.load %arg1[%c9] : memref<16xf32, #tpu.memory_space<smem>>
    %c10 = arith.constant 10 : index
    %10 = memref.load %arg1[%c10] : memref<16xf32, #tpu.memory_space<smem>>
    %c11 = arith.constant 11 : index
    %11 = memref.load %arg1[%c11] : memref<16xf32, #tpu.memory_space<smem>>
    %c12 = arith.constant 12 : index
    %12 = memref.load %arg1[%c12] : memref<16xf32, #tpu.memory_space<smem>>
    %c13 = arith.constant 13 : index
    %13 = memref.load %arg1[%c13] : memref<16xf32, #tpu.memory_space<smem>>
    %c14 = arith.constant 14 : index
    %14 = memref.load %arg1[%c14] : memref<16xf32, #tpu.memory_space<smem>>
    %c15 = arith.constant 15 : index
    %15 = memref.load %arg1[%c15] : memref<16xf32, #tpu.memory_space<smem>>
    %c0_0 = arith.constant 0 : index
    %16 = memref.load %arg2[%c0_0] : memref<16xf32, #tpu.memory_space<smem>>
    %c1_1 = arith.constant 1 : index
    %17 = memref.load %arg2[%c1_1] : memref<16xf32, #tpu.memory_space<smem>>
    %c2_2 = arith.constant 2 : index
    %18 = memref.load %arg2[%c2_2] : memref<16xf32, #tpu.memory_space<smem>>
    %c3_3 = arith.constant 3 : index
    %19 = memref.load %arg2[%c3_3] : memref<16xf32, #tpu.memory_space<smem>>
    %c4_4 = arith.constant 4 : index
    %20 = memref.load %arg2[%c4_4] : memref<16xf32, #tpu.memory_space<smem>>
    %c5_5 = arith.constant 5 : index
    %21 = memref.load %arg2[%c5_5] : memref<16xf32, #tpu.memory_space<smem>>
    %c6_6 = arith.constant 6 : index
    %22 = memref.load %arg2[%c6_6] : memref<16xf32, #tpu.memory_space<smem>>
    %c7_7 = arith.constant 7 : index
    %23 = memref.load %arg2[%c7_7] : memref<16xf32, #tpu.memory_space<smem>>
    %c8_8 = arith.constant 8 : index
    %24 = memref.load %arg2[%c8_8] : memref<16xf32, #tpu.memory_space<smem>>
    %c9_9 = arith.constant 9 : index
    %25 = memref.load %arg2[%c9_9] : memref<16xf32, #tpu.memory_space<smem>>
    %c10_10 = arith.constant 10 : index
    %26 = memref.load %arg2[%c10_10] : memref<16xf32, #tpu.memory_space<smem>>
    %c11_11 = arith.constant 11 : index
    %27 = memref.load %arg2[%c11_11] : memref<16xf32, #tpu.memory_space<smem>>
    %c12_12 = arith.constant 12 : index
    %28 = memref.load %arg2[%c12_12] : memref<16xf32, #tpu.memory_space<smem>>
    %c13_13 = arith.constant 13 : index
    %29 = memref.load %arg2[%c13_13] : memref<16xf32, #tpu.memory_space<smem>>
    %c14_14 = arith.constant 14 : index
    %30 = memref.load %arg2[%c14_14] : memref<16xf32, #tpu.memory_space<smem>>
    %c15_15 = arith.constant 15 : index
    %31 = memref.load %arg2[%c15_15] : memref<16xf32, #tpu.memory_space<smem>>
    %c0_16 = arith.constant 0 : index
    %32 = memref.load %arg3[%c0_16] : memref<16xf32, #tpu.memory_space<smem>>
    %c1_17 = arith.constant 1 : index
    %33 = memref.load %arg3[%c1_17] : memref<16xf32, #tpu.memory_space<smem>>
    %c2_18 = arith.constant 2 : index
    %34 = memref.load %arg3[%c2_18] : memref<16xf32, #tpu.memory_space<smem>>
    %c3_19 = arith.constant 3 : index
    %35 = memref.load %arg3[%c3_19] : memref<16xf32, #tpu.memory_space<smem>>
    %c4_20 = arith.constant 4 : index
    %36 = memref.load %arg3[%c4_20] : memref<16xf32, #tpu.memory_space<smem>>
    %c5_21 = arith.constant 5 : index
    %37 = memref.load %arg3[%c5_21] : memref<16xf32, #tpu.memory_space<smem>>
    %c6_22 = arith.constant 6 : index
    %38 = memref.load %arg3[%c6_22] : memref<16xf32, #tpu.memory_space<smem>>
    %c7_23 = arith.constant 7 : index
    %39 = memref.load %arg3[%c7_23] : memref<16xf32, #tpu.memory_space<smem>>
    %c8_24 = arith.constant 8 : index
    %40 = memref.load %arg3[%c8_24] : memref<16xf32, #tpu.memory_space<smem>>
    %c9_25 = arith.constant 9 : index
    %41 = memref.load %arg3[%c9_25] : memref<16xf32, #tpu.memory_space<smem>>
    %c10_26 = arith.constant 10 : index
    %42 = memref.load %arg3[%c10_26] : memref<16xf32, #tpu.memory_space<smem>>
    %c11_27 = arith.constant 11 : index
    %43 = memref.load %arg3[%c11_27] : memref<16xf32, #tpu.memory_space<smem>>
    %c12_28 = arith.constant 12 : index
    %44 = memref.load %arg3[%c12_28] : memref<16xf32, #tpu.memory_space<smem>>
    %c13_29 = arith.constant 13 : index
    %45 = memref.load %arg3[%c13_29] : memref<16xf32, #tpu.memory_space<smem>>
    %c14_30 = arith.constant 14 : index
    %46 = memref.load %arg3[%c14_30] : memref<16xf32, #tpu.memory_space<smem>>
    %c15_31 = arith.constant 15 : index
    %47 = memref.load %arg3[%c15_31] : memref<16xf32, #tpu.memory_space<smem>>
    %c0_32 = arith.constant 0 : index
    %48 = memref.load %arg4[%c0_32] : memref<1xf32, #tpu.memory_space<smem>>
    %c0_i32 = arith.constant 0 : i32
    %c2_i32 = arith.constant 2 : i32
    %49 = arith.addi %c0_i32, %c2_i32 : i32
    %c1_i32 = arith.constant 1 : i32
    scf.for %arg7 = %c0_i32 to %49 step %c1_i32  : i32 {
      %c8_i32 = arith.constant 8 : i32
      %50 = arith.muli %arg7, %c8_i32 : i32
      %51 = tpu.assume_multiple %50, 8 : i32
      %52 = arith.index_cast %51 : i32 to index
      %c0_34 = arith.constant 0 : index
      %53 = vector.load %arg5[%52, %c0_34] : memref<16x1024xf32, #tpu.memory_space<vmem>>, vector<8x1024xf32>
      %54 = vector.broadcast %0 : f32 to vector<8x1024xf32>
      %55 = arith.mulf %54, %53 : vector<8x1024xf32>
      %56 = vector.broadcast %16 : f32 to vector<8x1024xf32>
      %57 = arith.addf %55, %56 : vector<8x1024xf32>
      %cst = arith.constant 0.000000e+00 : f32
      %58 = vector.broadcast %cst : f32 to vector<8x1024xf32>
      %59 = arith.maximumf %57, %58 : vector<8x1024xf32>
      %60 = vector.broadcast %32 : f32 to vector<8x1024xf32>
      %61 = arith.mulf %60, %59 : vector<8x1024xf32>
      %62 = vector.broadcast %1 : f32 to vector<8x1024xf32>
      %63 = arith.mulf %62, %53 : vector<8x1024xf32>
      %64 = vector.broadcast %17 : f32 to vector<8x1024xf32>
      %65 = arith.addf %63, %64 : vector<8x1024xf32>
      %cst_35 = arith.constant 0.000000e+00 : f32
      %66 = vector.broadcast %cst_35 : f32 to vector<8x1024xf32>
      %67 = arith.maximumf %65, %66 : vector<8x1024xf32>
      %68 = vector.broadcast %33 : f32 to vector<8x1024xf32>
      %69 = arith.mulf %68, %67 : vector<8x1024xf32>
      %70 = vector.broadcast %2 : f32 to vector<8x1024xf32>
      %71 = arith.mulf %70, %53 : vector<8x1024xf32>
      %72 = vector.broadcast %18 : f32 to vector<8x1024xf32>
      %73 = arith.addf %71, %72 : vector<8x1024xf32>
      %cst_36 = arith.constant 0.000000e+00 : f32
      %74 = vector.broadcast %cst_36 : f32 to vector<8x1024xf32>
      %75 = arith.maximumf %73, %74 : vector<8x1024xf32>
      %76 = vector.broadcast %34 : f32 to vector<8x1024xf32>
      %77 = arith.mulf %76, %75 : vector<8x1024xf32>
      %78 = vector.broadcast %3 : f32 to vector<8x1024xf32>
      %79 = arith.mulf %78, %53 : vector<8x1024xf32>
      %80 = vector.broadcast %19 : f32 to vector<8x1024xf32>
      %81 = arith.addf %79, %80 : vector<8x1024xf32>
      %cst_37 = arith.constant 0.000000e+00 : f32
      %82 = vector.broadcast %cst_37 : f32 to vector<8x1024xf32>
      %83 = arith.maximumf %81, %82 : vector<8x1024xf32>
      %84 = vector.broadcast %35 : f32 to vector<8x1024xf32>
      %85 = arith.mulf %84, %83 : vector<8x1024xf32>
      %86 = vector.broadcast %4 : f32 to vector<8x1024xf32>
      %87 = arith.mulf %86, %53 : vector<8x1024xf32>
      %88 = vector.broadcast %20 : f32 to vector<8x1024xf32>
      %89 = arith.addf %87, %88 : vector<8x1024xf32>
      %cst_38 = arith.constant 0.000000e+00 : f32
      %90 = vector.broadcast %cst_38 : f32 to vector<8x1024xf32>
      %91 = arith.maximumf %89, %90 : vector<8x1024xf32>
      %92 = vector.broadcast %36 : f32 to vector<8x1024xf32>
      %93 = arith.mulf %92, %91 : vector<8x1024xf32>
      %94 = arith.addf %61, %93 : vector<8x1024xf32>
      %95 = vector.broadcast %5 : f32 to vector<8x1024xf32>
      %96 = arith.mulf %95, %53 : vector<8x1024xf32>
      %97 = vector.broadcast %21 : f32 to vector<8x1024xf32>
      %98 = arith.addf %96, %97 : vector<8x1024xf32>
      %cst_39 = arith.constant 0.000000e+00 : f32
      %99 = vector.broadcast %cst_39 : f32 to vector<8x1024xf32>
      %100 = arith.maximumf %98, %99 : vector<8x1024xf32>
      %101 = vector.broadcast %37 : f32 to vector<8x1024xf32>
      %102 = arith.mulf %101, %100 : vector<8x1024xf32>
      %103 = arith.addf %69, %102 : vector<8x1024xf32>
      %104 = vector.broadcast %6 : f32 to vector<8x1024xf32>
      %105 = arith.mulf %104, %53 : vector<8x1024xf32>
      %106 = vector.broadcast %22 : f32 to vector<8x1024xf32>
      %107 = arith.addf %105, %106 : vector<8x1024xf32>
      %cst_40 = arith.constant 0.000000e+00 : f32
      %108 = vector.broadcast %cst_40 : f32 to vector<8x1024xf32>
      %109 = arith.maximumf %107, %108 : vector<8x1024xf32>
      %110 = vector.broadcast %38 : f32 to vector<8x1024xf32>
      %111 = arith.mulf %110, %109 : vector<8x1024xf32>
      %112 = arith.addf %77, %111 : vector<8x1024xf32>
      %113 = vector.broadcast %7 : f32 to vector<8x1024xf32>
      %114 = arith.mulf %113, %53 : vector<8x1024xf32>
      %115 = vector.broadcast %23 : f32 to vector<8x1024xf32>
      %116 = arith.addf %114, %115 : vector<8x1024xf32>
      %cst_41 = arith.constant 0.000000e+00 : f32
      %117 = vector.broadcast %cst_41 : f32 to vector<8x1024xf32>
      %118 = arith.maximumf %116, %117 : vector<8x1024xf32>
      %119 = vector.broadcast %39 : f32 to vector<8x1024xf32>
      %120 = arith.mulf %119, %118 : vector<8x1024xf32>
      %121 = arith.addf %85, %120 : vector<8x1024xf32>
      %122 = vector.broadcast %8 : f32 to vector<8x1024xf32>
      %123 = arith.mulf %122, %53 : vector<8x1024xf32>
      %124 = vector.broadcast %24 : f32 to vector<8x1024xf32>
      %125 = arith.addf %123, %124 : vector<8x1024xf32>
      %cst_42 = arith.constant 0.000000e+00 : f32
      %126 = vector.broadcast %cst_42 : f32 to vector<8x1024xf32>
      %127 = arith.maximumf %125, %126 : vector<8x1024xf32>
      %128 = vector.broadcast %40 : f32 to vector<8x1024xf32>
      %129 = arith.mulf %128, %127 : vector<8x1024xf32>
      %130 = arith.addf %94, %129 : vector<8x1024xf32>
      %131 = vector.broadcast %9 : f32 to vector<8x1024xf32>
      %132 = arith.mulf %131, %53 : vector<8x1024xf32>
      %133 = vector.broadcast %25 : f32 to vector<8x1024xf32>
      %134 = arith.addf %132, %133 : vector<8x1024xf32>
      %cst_43 = arith.constant 0.000000e+00 : f32
      %135 = vector.broadcast %cst_43 : f32 to vector<8x1024xf32>
      %136 = arith.maximumf %134, %135 : vector<8x1024xf32>
      %137 = vector.broadcast %41 : f32 to vector<8x1024xf32>
      %138 = arith.mulf %137, %136 : vector<8x1024xf32>
      %139 = arith.addf %103, %138 : vector<8x1024xf32>
      %140 = vector.broadcast %10 : f32 to vector<8x1024xf32>
      %141 = arith.mulf %140, %53 : vector<8x1024xf32>
      %142 = vector.broadcast %26 : f32 to vector<8x1024xf32>
      %143 = arith.addf %141, %142 : vector<8x1024xf32>
      %cst_44 = arith.constant 0.000000e+00 : f32
      %144 = vector.broadcast %cst_44 : f32 to vector<8x1024xf32>
      %145 = arith.maximumf %143, %144 : vector<8x1024xf32>
      %146 = vector.broadcast %42 : f32 to vector<8x1024xf32>
      %147 = arith.mulf %146, %145 : vector<8x1024xf32>
      %148 = arith.addf %112, %147 : vector<8x1024xf32>
      %149 = vector.broadcast %11 : f32 to vector<8x1024xf32>
      %150 = arith.mulf %149, %53 : vector<8x1024xf32>
      %151 = vector.broadcast %27 : f32 to vector<8x1024xf32>
      %152 = arith.addf %150, %151 : vector<8x1024xf32>
      %cst_45 = arith.constant 0.000000e+00 : f32
      %153 = vector.broadcast %cst_45 : f32 to vector<8x1024xf32>
      %154 = arith.maximumf %152, %153 : vector<8x1024xf32>
      %155 = vector.broadcast %43 : f32 to vector<8x1024xf32>
      %156 = arith.mulf %155, %154 : vector<8x1024xf32>
      %157 = arith.addf %121, %156 : vector<8x1024xf32>
      %158 = vector.broadcast %12 : f32 to vector<8x1024xf32>
      %159 = arith.mulf %158, %53 : vector<8x1024xf32>
      %160 = vector.broadcast %28 : f32 to vector<8x1024xf32>
      %161 = arith.addf %159, %160 : vector<8x1024xf32>
      %cst_46 = arith.constant 0.000000e+00 : f32
      %162 = vector.broadcast %cst_46 : f32 to vector<8x1024xf32>
      %163 = arith.maximumf %161, %162 : vector<8x1024xf32>
      %164 = vector.broadcast %44 : f32 to vector<8x1024xf32>
      %165 = arith.mulf %164, %163 : vector<8x1024xf32>
      %166 = arith.addf %130, %165 : vector<8x1024xf32>
      %167 = vector.broadcast %13 : f32 to vector<8x1024xf32>
      %168 = arith.mulf %167, %53 : vector<8x1024xf32>
      %169 = vector.broadcast %29 : f32 to vector<8x1024xf32>
      %170 = arith.addf %168, %169 : vector<8x1024xf32>
      %cst_47 = arith.constant 0.000000e+00 : f32
      %171 = vector.broadcast %cst_47 : f32 to vector<8x1024xf32>
      %172 = arith.maximumf %170, %171 : vector<8x1024xf32>
      %173 = vector.broadcast %45 : f32 to vector<8x1024xf32>
      %174 = arith.mulf %173, %172 : vector<8x1024xf32>
      %175 = arith.addf %139, %174 : vector<8x1024xf32>
      %176 = vector.broadcast %14 : f32 to vector<8x1024xf32>
      %177 = arith.mulf %176, %53 : vector<8x1024xf32>
      %178 = vector.broadcast %30 : f32 to vector<8x1024xf32>
      %179 = arith.addf %177, %178 : vector<8x1024xf32>
      %cst_48 = arith.constant 0.000000e+00 : f32
      %180 = vector.broadcast %cst_48 : f32 to vector<8x1024xf32>
      %181 = arith.maximumf %179, %180 : vector<8x1024xf32>
      %182 = vector.broadcast %46 : f32 to vector<8x1024xf32>
      %183 = arith.mulf %182, %181 : vector<8x1024xf32>
      %184 = arith.addf %148, %183 : vector<8x1024xf32>
      %185 = vector.broadcast %15 : f32 to vector<8x1024xf32>
      %186 = arith.mulf %185, %53 : vector<8x1024xf32>
      %187 = vector.broadcast %31 : f32 to vector<8x1024xf32>
      %188 = arith.addf %186, %187 : vector<8x1024xf32>
      %cst_49 = arith.constant 0.000000e+00 : f32
      %189 = vector.broadcast %cst_49 : f32 to vector<8x1024xf32>
      %190 = arith.maximumf %188, %189 : vector<8x1024xf32>
      %191 = vector.broadcast %47 : f32 to vector<8x1024xf32>
      %192 = arith.mulf %191, %190 : vector<8x1024xf32>
      %193 = arith.addf %157, %192 : vector<8x1024xf32>
      %194 = arith.addf %166, %175 : vector<8x1024xf32>
      %195 = arith.addf %184, %193 : vector<8x1024xf32>
      %196 = arith.addf %194, %195 : vector<8x1024xf32>
      %197 = vector.broadcast %48 : f32 to vector<8x1024xf32>
      %198 = arith.addf %196, %197 : vector<8x1024xf32>
      %199 = math.exp %198 : vector<8x1024xf32>
      %cst_50 = arith.constant 1.000000e+00 : f32
      %200 = vector.broadcast %cst_50 : f32 to vector<8x1024xf32>
      %201 = arith.addf %200, %199 : vector<8x1024xf32>
      %202 = tpu.reciprocal %201 {approx = true} : vector<8x1024xf32> -> vector<8x1024xf32>
      %203 = arith.index_cast %51 : i32 to index
      %c0_51 = arith.constant 0 : index
      %204 = vector.load %arg6[%203, %c0_51] : memref<16x1024xf32, #tpu.memory_space<vmem>>, vector<8x1024xf32>
      tpu.vector_store %arg6[%203, %c0_51], %202 {strides = array<i32>} : memref<16x1024xf32, #tpu.memory_space<vmem>>, vector<8x1024xf32>,
    }
    %c2_i32_33 = arith.constant 2 : i32
    return
  }
  func.func @transform_0(%arg0: i32) -> i32 {
    %c0_i32 = arith.constant 0 : i32
    %c0_i32_0 = arith.constant 0 : i32
    return %c0_i32 : i32
  }
  func.func @transform_1(%arg0: i32) -> i32 {
    %c0_i32 = arith.constant 0 : i32
    %c0_i32_0 = arith.constant 0 : i32
    return %c0_i32 : i32
  }
  func.func @transform_2(%arg0: i32) -> i32 {
    %c0_i32 = arith.constant 0 : i32
    %c0_i32_0 = arith.constant 0 : i32
    return %c0_i32 : i32
  }
  func.func @transform_3(%arg0: i32) -> i32 {
    %c0_i32 = arith.constant 0 : i32
    %c0_i32_0 = arith.constant 0 : i32
    return %c0_i32 : i32
  }
  func.func @transform_4(%arg0: i32) -> (i32, i32) {
    %c0_i32 = arith.constant 0 : i32
    %c0_i32_0 = arith.constant 0 : i32
    return %arg0, %c0_i32 : i32, i32
  }
  func.func @transform_5(%arg0: i32) -> (i32, i32) {
    %c0_i32 = arith.constant 0 : i32
    %c0_i32_0 = arith.constant 0 : i32
    return %arg0, %c0_i32 : i32, i32
  }
}

</mosaic_0001>

<llo_original>
// kernel: tpu_custom_call.1
$region0: #{tpu_custom_call.1}
  #allocation0 [shape = 'u32[]', space=smem, size = 0x4, offset = 0x4, fixed_abs, tag = 'smem constant byte address 0x4 - core index']
  #allocation1 [shape = 'u32[144,128]{1,0:T(1,128)}', space=vmem, size = 0x12000, scoped, tag = 'internal scratch']
  #allocation2 [shape = 'f32[1]{0:T(128)S(6)}', space=smem, size = 0x200, scoped, tag = 'scoped memory for tpu_custom_call.1']
  %s0 = inlined_call_operand.vmem [shape: f32[16], index: 0, kind: input, shape index: {}]
  %s1 = inlined_call_operand.vmem [shape: f32[16], index: 1, kind: input, shape index: {}]
  %s2 = inlined_call_operand.vmem [shape: f32[16], index: 2, kind: input, shape index: {}]
  %s3 = inlined_call_operand.<no memory space> [shape: f32[1], index: 3, kind: input, shape index: {}]
  %s4 = inlined_call_operand.hbm [shape: f32[32,1024], index: 4, kind: input, shape index: {}]
  %s5 = inlined_call_operand.hbm [shape: f32[32,1024], index: 5, kind: output, shape index: {}]
  %s6 = sld [smem:[#allocation0]]
  $region76: #{tpu_custom_call.1} parent=0
    _
  %s8 = ssub.s32 1, %s6
  %s9 = scalar_select 0, %s8, %s6
  %10 = sst [smem:[#allocation2]] %s3
  $region1: #{tpu_custom_call.1} parent=0
    #allocation3 [shape = 'u8[512]{0}', space=smem, size = 0x200, scoped, tag = 'input window, operand 0, single buffered']
    #allocation4 [shape = 's32[2]{0}', space=sflag, size = 0x8, scoped, tag = 'scoped memory for tpu_custom_call.1']
    #allocation5 [shape = 's32[2]{0}', space=sflag, size = 0x8, scoped, tag = 'scoped memory for tpu_custom_call.1']
    #allocation6 [shape = 's32[2]{0}', space=sflag, size = 0x8, scoped, tag = 'scoped memory for tpu_custom_call.1']
    #allocation7 [shape = 'u8[512]{0}', space=smem, size = 0x200, scoped, tag = 'input window, operand 1, single buffered']
    #allocation8 [shape = 's32[1]{0}', space=sflag, size = 0x4, scoped, tag = 'scoped memory for tpu_custom_call.1']
    #allocation9 [shape = 'u8[512]{0}', space=smem, size = 0x200, scoped, tag = 'input window, operand 2, single buffered']
    #allocation10 [shape = 'u8[131072]{0}', space=vmem, size = 0x20000, scoped, tag = 'input window, operand 4']
    #allocation11 [shape = 'u8[131072]{0}', space=vmem, size = 0x20000, scoped, tag = 'output window, operand 0']
    %11 = vsyncpa [#allocation6], 0
    %12 = vsyncpa [#allocation8], 0
    %13 = vsyncpa [#allocation4], 0
    %s14 = scalar_lea.sflag [#allocation4], 1
    %15 = vsyncpa %s14, 0
    %16 = vsyncpa [#allocation5], 0
    %s17 = scalar_lea.sflag [#allocation5], 1
    %18 = vsyncpa %s17, 0
    loop: start=0, step=1, limit=4
    $region2: #{tpu_custom_call.1} parent=1 // loop_pre_header
      _
    $region3: #{tpu_custom_call.1} parent=1 // loop_header
      %s20 = sphi 0, %s24
      %p21 = scmp.ge.s32.totalorder %s20, 4
      %s28 = sphi 0, %s28
      %s30 = sphi 0, %s28
      %s31 = sphi 0, %s30
      %s45 = sphi 0, %s31
      %s49 = sphi 0, %s49
      %s51 = sphi 0, %s49
      %s52 = sphi 0, %s51
      %s66 = sphi 0, %s52
      %s70 = sphi 0, %s70
      %s72 = sphi 0, %s70
      %s73 = sphi 0, %s72
      %s87 = sphi 0, %s73
      %s91 = sphi 0, %s91
      %s93 = sphi 0, %s91
      %s94 = sphi 0, %s93
      %s108 = sphi 0, %s94
      %s114 = sphi 0, %s116
      %s117 = sphi 0, %s114
      %s118 = sphi 0, %s117
      %s134 = sphi 0, %s118
      %s140 = sphi 0, %s142
      %s143 = sphi 0, %s140
      %s144 = sphi 0, %s143
      %s160 = sphi 0, %s144
    $region4: #{tpu_custom_call.1} parent=1 // loop_header_branch
      %23 = sbr.rel (%p21) target = $region8
    $region5: #{tpu_custom_call.1} parent=1 // loop_body
      %s25 = ssub.s32 %s20, 1
      %s26 = ssub.s32 %s20, 2
      %s27 = sadd.s32 %s20, 1
      %s29 = sadd.s32 %s28, 1
      %p32 = scmp.eq.s32.totalorder %s20, 1
      %p33 = scmp.ne.s32.totalorder %s28, %s30
      %p34 = scmp.eq.s32.totalorder %s20, 0
      %p35 = por %p33, %p34
      %p36 = scmp.ne.s32.totalorder %s28, %s30
      %p37 = scmp.eq.s32.totalorder %s25, 1
      %p38 = por %p36, %p37
      %p39 = scmp.ne.s32.totalorder %s30, %s31
      %p40 = scmp.eq.s32.totalorder %s25, 0
      %p41 = por %p39, %p40
      %p42 = scmp.ne.s32.totalorder %s30, %s31
      %p43 = scmp.eq.s32.totalorder %s26, 1
      %p44 = por %p42, %p43
      %p46 = scmp.ne.s32.totalorder %s31, %s45
      %p47 = scmp.eq.s32.totalorder %s26, 0
      %p48 = por %p46, %p47
      %s50 = sadd.s32 %s49, 1
      %p53 = scmp.eq.s32.totalorder %s20, 1
      %p54 = scmp.ne.s32.totalorder %s49, %s51
      %p55 = scmp.eq.s32.totalorder %s20, 0
      %p56 = por %p54, %p55
      %p57 = scmp.ne.s32.totalorder %s49, %s51
      %p58 = scmp.eq.s32.totalorder %s25, 1
      %p59 = por %p57, %p58
      %p60 = scmp.ne.s32.totalorder %s51, %s52
      %p61 = scmp.eq.s32.totalorder %s25, 0
      %p62 = por %p60, %p61
      %p63 = scmp.ne.s32.totalorder %s51, %s52
      %p64 = scmp.eq.s32.totalorder %s26, 1
      %p65 = por %p63, %p64
      %p67 = scmp.ne.s32.totalorder %s52, %s66
      %p68 = scmp.eq.s32.totalorder %s26, 0
      %p69 = por %p67, %p68
      %s71 = sadd.s32 %s70, 1
      %p74 = scmp.eq.s32.totalorder %s20, 1
      %p75 = scmp.ne.s32.totalorder %s70, %s72
      %p76 = scmp.eq.s32.totalorder %s20, 0
      %p77 = por %p75, %p76
      %p78 = scmp.ne.s32.totalorder %s70, %s72
      %p79 = scmp.eq.s32.totalorder %s25, 1
      %p80 = por %p78, %p79
      %p81 = scmp.ne.s32.totalorder %s72, %s73
      %p82 = scmp.eq.s32.totalorder %s25, 0
      %p83 = por %p81, %p82
      %p84 = scmp.ne.s32.totalorder %s72, %s73
      %p85 = scmp.eq.s32.totalorder %s26, 1
      %p86 = por %p84, %p85
      %p88 = scmp.ne.s32.totalorder %s73, %s87
      %p89 = scmp.eq.s32.totalorder %s26, 0
      %p90 = por %p88, %p89
      %s92 = sadd.s32 %s91, 1
      %p95 = scmp.eq.s32.totalorder %s20, 1
      %p96 = scmp.ne.s32.totalorder %s91, %s93
      %p97 = scmp.eq.s32.totalorder %s20, 0
      %p98 = por %p96, %p97
      %p99 = scmp.ne.s32.totalorder %s91, %s93
      %p100 = scmp.eq.s32.totalorder %s25, 1
      %p101 = por %p99, %p100
      %p102 = scmp.ne.s32.totalorder %s93, %s94
      %p103 = scmp.eq.s32.totalorder %s25, 0
      %p104 = por %p102, %p103
      %p105 = scmp.ne.s32.totalorder %s93, %s94
      %p106 = scmp.eq.s32.totalorder %s26, 1
      %p107 = por %p105, %p106
      %p109 = scmp.ne.s32.totalorder %s94, %s108
      %p110 = scmp.eq.s32.totalorder %s26, 0
      %p111 = por %p109, %p110
      %s112 = ssub.s32 %s20, %s27
      %p113 = scmp.eq.s32.totalorder %s112, 0
      %s115 = sadd.s32 %s114, 1
      %s116 = scalar_select %p113, %s114, %s115
      %p119 = pneg %p113
      %p120 = scmp.eq.s32.totalorder %s20, 1
      %p121 = por %p119, %p120
      %p122 = scmp.ne.s32.totalorder %s114, %s117
      %p123 = scmp.eq.s32.totalorder %s20, 0
      %p124 = por %p122, %p123
      %p125 = scmp.ne.s32.totalorder %s114, %s117
      %p126 = scmp.eq.s32.totalorder %s25, 1
      %p127 = por %p125, %p126
      %p128 = scmp.ne.s32.totalorder %s117, %s118
      %p129 = scmp.eq.s32.totalorder %s25, 0
      %p130 = por %p128, %p129
      %p131 = scmp.ne.s32.totalorder %s117, %s118
      %p132 = scmp.eq.s32.totalorder %s26, 1
      %p133 = por %p131, %p132
      %p135 = scmp.ne.s32.totalorder %s118, %s134
      %p136 = scmp.eq.s32.totalorder %s26, 0
      %p137 = por %p135, %p136
      %s138 = ssub.s32 %s20, %s27
      %p139 = scmp.eq.s32.totalorder %s138, 0
      %s141 = sadd.s32 %s140, 1
      %s142 = scalar_select %p139, %s140, %s141
      %p145 = pneg %p139
      %p146 = scmp.eq.s32.totalorder %s20, 1
      %p147 = por %p145, %p146
      %p148 = scmp.ne.s32.totalorder %s140, %s143
      %p149 = scmp.eq.s32.totalorder %s20, 0
      %p150 = por %p148, %p149
      %p151 = scmp.ne.s32.totalorder %s140, %s143
      %p152 = scmp.eq.s32.totalorder %s25, 1
      %p153 = por %p151, %p152
      %p154 = scmp.ne.s32.totalorder %s143, %s144
      %p155 = scmp.eq.s32.totalorder %s25, 0
      %p156 = por %p154, %p155
      %p157 = scmp.ne.s32.totalorder %s143, %s144
      %p158 = scmp.eq.s32.totalorder %s26, 1
      %p159 = por %p157, %p158
      %p161 = scmp.ne.s32.totalorder %s144, %s160
      %p162 = scmp.eq.s32.totalorder %s26, 0
      %p163 = por %p161, %p162
      %p164 = scmp.le.s32.totalorder 1, %s20
      %p165 = scmp.lt.s32.totalorder %s20, 3
      %p166 = pnand %p164, %p165
      %p167 = pneg %p166
      // Predicated region
      $region9: #{tpu_custom_call.1} parent=5 // pred_check
        _
      $region10: #{tpu_custom_call.1} parent=5 // pred_check_branch
        %169 = sbr.rel (%p166) target = $region12
      $region11: #{tpu_custom_call.1} parent=5 // pred_region
        %s170 = ssub.s32 %s20, 1
        // Predicated region
        $region13: #{tpu_custom_call.1} parent=11 // pred_check
          %p171 = pneg %p41
        $region14: #{tpu_custom_call.1} parent=11 // pred_check_branch
          %173 = sbr.rel (%p171) target = $region16
        $region15: #{tpu_custom_call.1} parent=11 // pred_region
          %s175 = ssub.s32 16, 16
          %176 = vsyncadd [#allocation6], %s175
          %s178 = sshll.u32 %s0, 4
          %s179 = int_to_ptr.vmem [resolvable:$true] %s178
          %181 = dma.vmem_to_smem %s179, 16, [#allocation3], [#allocation6]
        $region16: #{tpu_custom_call.1} parent=11 // pred_fallthru
          _
        // Predicated region
        $region17: #{tpu_custom_call.1} parent=11 // pred_check
          %p182 = pneg %p62
        $region18: #{tpu_custom_call.1} parent=11 // pred_check_branch
          %184 = sbr.rel (%p182) target = $region20
        $region19: #{tpu_custom_call.1} parent=11 // pred_region
          %s186 = ssub.s32 16, 16
          %187 = vsyncadd [#allocation8], %s186
          %s189 = sshll.u32 %s1, 4
          %s190 = int_to_ptr.vmem [resolvable:$true] %s189
          %192 = dma.vmem_to_smem %s190, 16, [#allocation7], [#allocation8]
        $region20: #{tpu_custom_call.1} parent=11 // pred_fallthru
          _
        // Predicated region
        $region21: #{tpu_custom_call.1} parent=11 // pred_check
          %p193 = pneg %p83
        $region22: #{tpu_custom_call.1} parent=11 // pred_check_branch
          %195 = sbr.rel (%p193) target = $region24
        $region23: #{tpu_custom_call.1} parent=11 // pred_region
          %s197 = ssub.s32 16, 16
          %198 = vsyncadd [#allocation8], %s197
          %s200 = sshll.u32 %s2, 4
          %s201 = int_to_ptr.vmem [resolvable:$true] %s200
          %203 = dma.vmem_to_smem %s201, 16, [#allocation9], [#allocation8]
        $region24: #{tpu_custom_call.1} parent=11 // pred_fallthru
          _
        // Predicated region
        $region25: #{tpu_custom_call.1} parent=11 // pred_check
          %p204 = pneg %p104
        $region26: #{tpu_custom_call.1} parent=11 // pred_check_branch
          %206 = sbr.rel (%p204) target = $region28
        $region27: #{tpu_custom_call.1} parent=11 // pred_region
          _
        $region28: #{tpu_custom_call.1} parent=11 // pred_fallthru
          _
      $region12: #{tpu_custom_call.1} parent=5 // pred_fallthru
        _
      %p207 = scmp.lt.s32.totalorder %s20, 2
      // Predicated region
      $region29: #{tpu_custom_call.1} parent=5 // pred_check
        %p208 = pneg %p207
      $region30: #{tpu_custom_call.1} parent=5 // pred_check_branch
        %210 = sbr.rel (%p208) target = $region32
      $region31: #{tpu_custom_call.1} parent=5 // pred_region
        // Predicated region
        $region33: #{tpu_custom_call.1} parent=31 // pred_check
          %p211 = pneg %p124
        $region34: #{tpu_custom_call.1} parent=31 // pred_check_branch
          %213 = sbr.rel (%p211) target = $region36
        $region35: #{tpu_custom_call.1} parent=31 // pred_region
          %s214 = sand.u32 %s114, 1
          %s215 = scalar_lea.sflag [#allocation4], %s214
          %s216 = sand.u32 %s114, 1
          %s217 = smul.addr %s216, 128
          %s218 = scalar_lea.vmem [#allocation10], %s217
          %s219 = smul.u32 2, %s20
          %s221 = ssub.s32 2048, 2048
          %222 = vsyncadd %s215, %s221
          %s223 = smul.addr %s219, 8
          %s224 = smul.addr %s223, 128
          %s225 = scalar_lea.hbm %s4, %s224
          %s226 = sshll.u32 %s218, 4
          %s227 = int_to_ptr.vmem [resolvable:$true] %s226
          %232 = dma.hbm_to_vmem [thread:$0]  %s225, 2048, %s227, %s215, 1024, 1024, 64
        $region36: #{tpu_custom_call.1} parent=31 // pred_fallthru
          _
      $region32: #{tpu_custom_call.1} parent=5 // pred_fallthru
        _
      %p233 = scmp.le.s32.totalorder 1, %s20
      %p234 = scmp.lt.s32.totalorder %s20, 3
      %p235 = pnand %p233, %p234
      %p236 = pneg %p235
      // Predicated region
      $region37: #{tpu_custom_call.1} parent=5 // pred_check
        _
      $region38: #{tpu_custom_call.1} parent=5 // pred_check_branch
        %238 = sbr.rel (%p235) target = $region40
      $region39: #{tpu_custom_call.1} parent=5 // pred_region
        %s239 = ssub.s32 %s20, 1
        // Predicated region
        $region41: #{tpu_custom_call.1} parent=39 // pred_check
          %p240 = pneg %p41
        $region42: #{tpu_custom_call.1} parent=39 // pred_check_branch
          %242 = sbr.rel (%p240) target = $region44
        $region43: #{tpu_custom_call.1} parent=39 // pred_region
          %243 = dma.done [#allocation6], 16
        $region44: #{tpu_custom_call.1} parent=39 // pred_fallthru
          _
        // Predicated region
        $region45: #{tpu_custom_call.1} parent=39 // pred_check
          %p244 = pneg %p62
        $region46: #{tpu_custom_call.1} parent=39 // pred_check_branch
          %246 = sbr.rel (%p244) target = $region48
        $region47: #{tpu_custom_call.1} parent=39 // pred_region
          %247 = dma.done [#allocation8], 16
        $region48: #{tpu_custom_call.1} parent=39 // pred_fallthru
          _
        // Predicated region
        $region49: #{tpu_custom_call.1} parent=39 // pred_check
          %p248 = pneg %p83
        $region50: #{tpu_custom_call.1} parent=39 // pred_check_branch
          %250 = sbr.rel (%p248) target = $region52
        $region51: #{tpu_custom_call.1} parent=39 // pred_region
          %251 = dma.done [#allocation8], 16
        $region52: #{tpu_custom_call.1} parent=39 // pred_fallthru
          _
        %s252 = sand.u32 %s117, 1
        %s253 = scalar_lea.sflag [#allocation4], %s252
        %s254 = sand.u32 %s117, 1
        %s255 = smul.addr %s254, 128
        %s256 = scalar_lea.vmem [#allocation10], %s255
        // Predicated region
        $region53: #{tpu_custom_call.1} parent=39 // pred_check
          %p257 = pneg %p130
        $region54: #{tpu_custom_call.1} parent=39 // pred_check_branch
          %259 = sbr.rel (%p257) target = $region56
        $region55: #{tpu_custom_call.1} parent=39 // pred_region
          %260 = dma.done %s253, 2048
        $region56: #{tpu_custom_call.1} parent=39 // pred_fallthru
          _
        %261 = sfence
        %p262 = pneg %p41
        %p263 = pneg %p38
        %p264 = pneg %p62
        %p265 = pneg %p59
        %p266 = pneg %p83
        %p267 = pneg %p80
        %p268 = pneg %p104
        %p269 = pneg %p101
        %s270 = sand.u32 %s117, 1
        %s271 = scalar_lea.sflag [#allocation4], %s270
        %s272 = sand.u32 %s117, 1
        %s273 = smul.addr %s272, 128
        %s274 = scalar_lea.vmem [#allocation10], %s273
        %p275 = pneg %p130
        %p276 = pneg %p127
        %p277 = pneg %p156
        %p278 = pneg %p153
        %s279 = sand.u32 %s143, 1
        %s280 = scalar_lea.sflag [#allocation5], %s279
        %s281 = sand.u32 %s143, 1
        %s282 = smul.addr %s281, 128
        %s283 = scalar_lea.vmem [#allocation11], %s282
        %s284 = smul.u32 2, %s25
        %s285 = smul.u32 2, %s25
        %s286 = sld [smem:[#allocation3]]
        %s287 = sld [smem:[#allocation3 + $0x1]]
        %s288 = sld [smem:[#allocation3 + $0x2]]
        %s289 = sld [smem:[#allocation3 + $0x3]]
        %s290 = sld [smem:[#allocation3 + $0x4]]
        %s291 = sld [smem:[#allocation3 + $0x5]]
        %s292 = sld [smem:[#allocation3 + $0x6]]
        %s293 = sld [smem:[#allocation3 + $0x7]]
        %s294 = sld [smem:[#allocation3 + $0x8]]
        %s295 = sld [smem:[#allocation3 + $0x9]]
        %s296 = sld [smem:[#allocation3 + $0xa]]
        %s297 = sld [smem:[#allocation3 + $0xb]]
        %s298 = sld [smem:[#allocation3 + $0xc]]
        %s299 = sld [smem:[#allocation3 + $0xd]]
        %s300 = sld [smem:[#allocation3 + $0xe]]
        %s301 = sld [smem:[#allocation3 + $0xf]]
        %s302 = sld [smem:[#allocation7]]
        %s303 = sld [smem:[#allocation7 + $0x1]]
        %s304 = sld [smem:[#allocation7 + $0x2]]
        %s305 = sld [smem:[#allocation7 + $0x3]]
        %s306 = sld [smem:[#allocation7 + $0x4]]
        %s307 = sld [smem:[#allocation7 + $0x5]]
        %s308 = sld [smem:[#allocation7 + $0x6]]
        %s309 = sld [smem:[#allocation7 + $0x7]]
        %s310 = sld [smem:[#allocation7 + $0x8]]
        %s311 = sld [smem:[#allocation7 + $0x9]]
        %s312 = sld [smem:[#allocation7 + $0xa]]
        %s313 = sld [smem:[#allocation7 + $0xb]]
        %s314 = sld [smem:[#allocation7 + $0xc]]
        %s315 = sld [smem:[#allocation7 + $0xd]]
        %s316 = sld [smem:[#allocation7 + $0xe]]
        %s317 = sld [smem:[#allocation7 + $0xf]]
        %s318 = sld [smem:[#allocation9]]
        %s319 = sld [smem:[#allocation9 + $0x1]]
        %s320 = sld [smem:[#allocation9 + $0x2]]
        %s321 = sld [smem:[#allocation9 + $0x3]]
        %s322 = sld [smem:[#allocation9 + $0x4]]
        %s323 = sld [smem:[#allocation9 + $0x5]]
        %s324 = sld [smem:[#allocation9 + $0x6]]
        %s325 = sld [smem:[#allocation9 + $0x7]]
        %s326 = sld [smem:[#allocation9 + $0x8]]
        %s327 = sld [smem:[#allocation9 + $0x9]]
        %s328 = sld [smem:[#allocation9 + $0xa]]
        %s329 = sld [smem:[#allocation9 + $0xb]]
        %s330 = sld [smem:[#allocation9 + $0xc]]
        %s331 = sld [smem:[#allocation9 + $0xd]]
        %s332 = sld [smem:[#allocation9 + $0xe]]
        %s333 = sld [smem:[#allocation9 + $0xf]]
        %s334 = sld [smem:[#allocation2]]
        loop: start=0, step=1, limit=2
        $region57: #{tpu_custom_call.1} parent=39 // loop_pre_header
          _
        $region58: #{tpu_custom_call.1} parent=39 // loop_header
          %s336 = sphi 0, %s340
          %p337 = scmp.ge.s32.totalorder %s336, 2
        $region59: #{tpu_custom_call.1} parent=39 // loop_header_branch
          %339 = sbr.rel (%p337) target = $region63
        $region60: #{tpu_custom_call.1} parent=39 // loop_body
          %s341 = smul.u32 %s336, 8
          %s342 = sshra.s32 %s341, 3
          %s343 = sand.u32 %s341, 7
          %s344 = smul.u32 %s342, 8
          %s345 = smul.addr %s344, 8
          %s346 = scalar_lea.vmem %s256, %s345 [#allocation10]
          %v347 = vld [vmem:[%s346] sm:$0xff]
          %v348 = vld [vmem:[%s346 + $0x8] sm:$0xff]
          %v349 = vld [vmem:[%s346 + $0x10] sm:$0xff]
          %v350 = vld [vmem:[%s346 + $0x18] sm:$0xff]
          %v351 = vld [vmem:[%s346 + $0x20] sm:$0xff]
          %v352 = vld [vmem:[%s346 + $0x28] sm:$0xff]
          %v353 = vld [vmem:[%s346 + $0x30] sm:$0xff]
          %v354 = vld [vmem:[%s346 + $0x38] sm:$0xff]
          %v355 = vstv %s286
          %v356 = vmul.f32 %v355, %v347
          %v357 = vmul.f32 %v355, %v348
          %v358 = vmul.f32 %v355, %v349
          %v359 = vmul.f32 %v355, %v350
          %v360 = vmul.f32 %v355, %v351
          %v361 = vmul.f32 %v355, %v352
          %v362 = vmul.f32 %v355, %v353
          %v363 = vmul.f32 %v355, %v354
          %v364 = vstv %s302
          %v365 = vadd.f32 %v356, %v364
          %v366 = vadd.f32 %v357, %v364
          %v367 = vadd.f32 %v358, %v364
          %v368 = vadd.f32 %v359, %v364
          %v369 = vadd.f32 %v360, %v364
          %v370 = vadd.f32 %v361, %v364
          %v371 = vadd.f32 %v362, %v364
          %v372 = vadd.f32 %v363, %v364
          %v373 = vmax.f32 %v365, 0.0
          %v374 = vmax.f32 %v366, 0.0
          %v375 = vmax.f32 %v367, 0.0
          %v376 = vmax.f32 %v368, 0.0
          %v377 = vmax.f32 %v369, 0.0
          %v378 = vmax.f32 %v370, 0.0
          %v379 = vmax.f32 %v371, 0.0
          %v380 = vmax.f32 %v372, 0.0
          %v381 = vstv %s318
          %v382 = vmul.f32 %v381, %v373
          %v383 = vmul.f32 %v381, %v374
          %v384 = vmul.f32 %v381, %v375
          %v385 = vmul.f32 %v381, %v376
          %v386 = vmul.f32 %v381, %v377
          %v387 = vmul.f32 %v381, %v378
          %v388 = vmul.f32 %v381, %v379
          %v389 = vmul.f32 %v381, %v380
          %v390 = vstv %s287
          %v391 = vmul.f32 %v390, %v347
          %v392 = vmul.f32 %v390, %v348
          %v393 = vmul.f32 %v390, %v349
          %v394 = vmul.f32 %v390, %v350
          %v395 = vmul.f32 %v390, %v351
          %v396 = vmul.f32 %v390, %v352
          %v397 = vmul.f32 %v390, %v353
          %v398 = vmul.f32 %v390, %v354
          %v399 = vstv %s303
          %v400 = vadd.f32 %v391, %v399
          %v401 = vadd.f32 %v392, %v399
          %v402 = vadd.f32 %v393, %v399
          %v403 = vadd.f32 %v394, %v399
          %v404 = vadd.f32 %v395, %v399
          %v405 = vadd.f32 %v396, %v399
          %v406 = vadd.f32 %v397, %v399
          %v407 = vadd.f32 %v398, %v399
          %v408 = vmax.f32 %v400, 0.0
          %v409 = vmax.f32 %v401, 0.0
          %v410 = vmax.f32 %v402, 0.0
          %v411 = vmax.f32 %v403, 0.0
          %v412 = vmax.f32 %v404, 0.0
          %v413 = vmax.f32 %v405, 0.0
          %v414 = vmax.f32 %v406, 0.0
          %v415 = vmax.f32 %v407, 0.0
          %v416 = vstv %s319
          %v417 = vmul.f32 %v416, %v408
          %v418 = vmul.f32 %v416, %v409
          %v419 = vmul.f32 %v416, %v410
          %v420 = vmul.f32 %v416, %v411
          %v421 = vmul.f32 %v416, %v412
          %v422 = vmul.f32 %v416, %v413
          %v423 = vmul.f32 %v416, %v414
          %v424 = vmul.f32 %v416, %v415
          %v425 = vstv %s288
          %v426 = vmul.f32 %v425, %v347
          %v427 = vmul.f32 %v425, %v348
          %v428 = vmul.f32 %v425, %v349
          %v429 = vmul.f32 %v425, %v350
          %v430 = vmul.f32 %v425, %v351
          %v431 = vmul.f32 %v425, %v352
          %v432 = vmul.f32 %v425, %v353
          %v433 = vmul.f32 %v425, %v354
          %v434 = vstv %s304
          %v435 = vadd.f32 %v426, %v434
          %v436 = vadd.f32 %v427, %v434
          %v437 = vadd.f32 %v428, %v434
          %v438 = vadd.f32 %v429, %v434
          %v439 = vadd.f32 %v430, %v434
          %v440 = vadd.f32 %v431, %v434
          %v441 = vadd.f32 %v432, %v434
          %v442 = vadd.f32 %v433, %v434
          %v443 = vmax.f32 %v435, 0.0
          %v444 = vmax.f32 %v436, 0.0
          %v445 = vmax.f32 %v437, 0.0
          %v446 = vmax.f32 %v438, 0.0
          %v447 = vmax.f32 %v439, 0.0
          %v448 = vmax.f32 %v440, 0.0
          %v449 = vmax.f32 %v441, 0.0
          %v450 = vmax.f32 %v442, 0.0
          %v451 = vstv %s320
          %v452 = vmul.f32 %v451, %v443
          %v453 = vmul.f32 %v451, %v444
          %v454 = vmul.f32 %v451, %v445
          %v455 = vmul.f32 %v451, %v446
          %v456 = vmul.f32 %v451, %v447
          %v457 = vmul.f32 %v451, %v448
          %v458 = vmul.f32 %v451, %v449
          %v459 = vmul.f32 %v451, %v450
          %v460 = vstv %s289
          %v461 = vmul.f32 %v460, %v347
          %v462 = vmul.f32 %v460, %v348
          %v463 = vmul.f32 %v460, %v349
          %v464 = vmul.f32 %v460, %v350
          %v465 = vmul.f32 %v460, %v351
          %v466 = vmul.f32 %v460, %v352
          %v467 = vmul.f32 %v460, %v353
          %v468 = vmul.f32 %v460, %v354
          %v469 = vstv %s305
          %v470 = vadd.f32 %v461, %v469
          %v471 = vadd.f32 %v462, %v469
          %v472 = vadd.f32 %v463, %v469
          %v473 = vadd.f32 %v464, %v469
          %v474 = vadd.f32 %v465, %v469
          %v475 = vadd.f32 %v466, %v469
          %v476 = vadd.f32 %v467, %v469
          %v477 = vadd.f32 %v468, %v469
          %v478 = vmax.f32 %v470, 0.0
          %v479 = vmax.f32 %v471, 0.0
          %v480 = vmax.f32 %v472, 0.0
          %v481 = vmax.f32 %v473, 0.0
          %v482 = vmax.f32 %v474, 0.0
          %v483 = vmax.f32 %v475, 0.0
          %v484 = vmax.f32 %v476, 0.0
          %v485 = vmax.f32 %v477, 0.0
          %v486 = vstv %s321
          %v487 = vmul.f32 %v486, %v478
          %v488 = vmul.f32 %v486, %v479
          %v489 = vmul.f32 %v486, %v480
          %v490 = vmul.f32 %v486, %v481
          %v491 = vmul.f32 %v486, %v482
          %v492 = vmul.f32 %v486, %v483
          %v493 = vmul.f32 %v486, %v484
          %v494 = vmul.f32 %v486, %v485
          %v495 = vstv %s290
          %v496 = vmul.f32 %v495, %v347
          %v497 = vmul.f32 %v495, %v348
          %v498 = vmul.f32 %v495, %v349
          %v499 = vmul.f32 %v495, %v350
          %v500 = vmul.f32 %v495, %v351
          %v501 = vmul.f32 %v495, %v352
          %v502 = vmul.f32 %v495, %v353
          %v503 = vmul.f32 %v495, %v354
          %v504 = vstv %s306
          %v505 = vadd.f32 %v496, %v504
          %v506 = vadd.f32 %v497, %v504
          %v507 = vadd.f32 %v498, %v504
          %v508 = vadd.f32 %v499, %v504
          %v509 = vadd.f32 %v500, %v504
          %v510 = vadd.f32 %v501, %v504
          %v511 = vadd.f32 %v502, %v504
          %v512 = vadd.f32 %v503, %v504
          %v513 = vmax.f32 %v505, 0.0
          %v514 = vmax.f32 %v506, 0.0
          %v515 = vmax.f32 %v507, 0.0
          %v516 = vmax.f32 %v508, 0.0
          %v517 = vmax.f32 %v509, 0.0
          %v518 = vmax.f32 %v510, 0.0
          %v519 = vmax.f32 %v511, 0.0
          %v520 = vmax.f32 %v512, 0.0
          %v521 = vstv %s322
          %v522 = vmul.f32 %v521, %v513
          %v523 = vmul.f32 %v521, %v514
          %v524 = vmul.f32 %v521, %v515
          %v525 = vmul.f32 %v521, %v516
          %v526 = vmul.f32 %v521, %v517
          %v527 = vmul.f32 %v521, %v518
          %v528 = vmul.f32 %v521, %v519
          %v529 = vmul.f32 %v521, %v520
          %v530 = vadd.f32 %v382, %v522
          %v531 = vadd.f32 %v383, %v523
          %v532 = vadd.f32 %v384, %v524
          %v533 = vadd.f32 %v385, %v525
          %v534 = vadd.f32 %v386, %v526
          %v535 = vadd.f32 %v387, %v527
          %v536 = vadd.f32 %v388, %v528
          %v537 = vadd.f32 %v389, %v529
          %v538 = vstv %s291
          %v539 = vmul.f32 %v538, %v347
          %v540 = vmul.f32 %v538, %v348
          %v541 = vmul.f32 %v538, %v349
          %v542 = vmul.f32 %v538, %v350
          %v543 = vmul.f32 %v538, %v351
          %v544 = vmul.f32 %v538, %v352
          %v545 = vmul.f32 %v538, %v353
          %v546 = vmul.f32 %v538, %v354
          %v547 = vstv %s307
          %v548 = vadd.f32 %v539, %v547
          %v549 = vadd.f32 %v540, %v547
          %v550 = vadd.f32 %v541, %v547
          %v551 = vadd.f32 %v542, %v547
          %v552 = vadd.f32 %v543, %v547
          %v553 = vadd.f32 %v544, %v547
          %v554 = vadd.f32 %v545, %v547
          %v555 = vadd.f32 %v546, %v547
          %v556 = vmax.f32 %v548, 0.0
          %v557 = vmax.f32 %v549, 0.0
          %v558 = vmax.f32 %v550, 0.0
          %v559 = vmax.f32 %v551, 0.0
          %v560 = vmax.f32 %v552, 0.0
          %v561 = vmax.f32 %v553, 0.0
          %v562 = vmax.f32 %v554, 0.0
          %v563 = vmax.f32 %v555, 0.0
          %v564 = vstv %s323
          %v565 = vmul.f32 %v564, %v556
          %v566 = vmul.f32 %v564, %v557
          %v567 = vmul.f32 %v564, %v558
          %v568 = vmul.f32 %v564, %v559
          %v569 = vmul.f32 %v564, %v560
          %v570 = vmul.f32 %v564, %v561
          %v571 = vmul.f32 %v564, %v562
          %v572 = vmul.f32 %v564, %v563
          %v573 = vadd.f32 %v417, %v565
          %v574 = vadd.f32 %v418, %v566
          %v575 = vadd.f32 %v419, %v567
          %v576 = vadd.f32 %v420, %v568
          %v577 = vadd.f32 %v421, %v569
          %v578 = vadd.f32 %v422, %v570
          %v579 = vadd.f32 %v423, %v571
          %v580 = vadd.f32 %v424, %v572
          %v581 = vstv %s292
          %v582 = vmul.f32 %v581, %v347
          %v583 = vmul.f32 %v581, %v348
          %v584 = vmul.f32 %v581, %v349
          %v585 = vmul.f32 %v581, %v350
          %v586 = vmul.f32 %v581, %v351
          %v587 = vmul.f32 %v581, %v352
          %v588 = vmul.f32 %v581, %v353
          %v589 = vmul.f32 %v581, %v354
          %v590 = vstv %s308
          %v591 = vadd.f32 %v582, %v590
          %v592 = vadd.f32 %v583, %v590
          %v593 = vadd.f32 %v584, %v590
          %v594 = vadd.f32 %v585, %v590
          %v595 = vadd.f32 %v586, %v590
          %v596 = vadd.f32 %v587, %v590
          %v597 = vadd.f32 %v588, %v590
          %v598 = vadd.f32 %v589, %v590
          %v599 = vmax.f32 %v591, 0.0
          %v600 = vmax.f32 %v592, 0.0
          %v601 = vmax.f32 %v593, 0.0
          %v602 = vmax.f32 %v594, 0.0
          %v603 = vmax.f32 %v595, 0.0
          %v604 = vmax.f32 %v596, 0.0
          %v605 = vmax.f32 %v597, 0.0
          %v606 = vmax.f32 %v598, 0.0
          %v607 = vstv %s324
          %v608 = vmul.f32 %v607, %v599
          %v609 = vmul.f32 %v607, %v600
          %v610 = vmul.f32 %v607, %v601
          %v611 = vmul.f32 %v607, %v602
          %v612 = vmul.f32 %v607, %v603
          %v613 = vmul.f32 %v607, %v604
          %v614 = vmul.f32 %v607, %v605
          %v615 = vmul.f32 %v607, %v606
          %v616 = vadd.f32 %v452, %v608
          %v617 = vadd.f32 %v453, %v609
          %v618 = vadd.f32 %v454, %v610
          %v619 = vadd.f32 %v455, %v611
          %v620 = vadd.f32 %v456, %v612
          %v621 = vadd.f32 %v457, %v613
          %v622 = vadd.f32 %v458, %v614
          %v623 = vadd.f32 %v459, %v615
          %v624 = vstv %s293
          %v625 = vmul.f32 %v624, %v347
          %v626 = vmul.f32 %v624, %v348
          %v627 = vmul.f32 %v624, %v349
          %v628 = vmul.f32 %v624, %v350
          %v629 = vmul.f32 %v624, %v351
          %v630 = vmul.f32 %v624, %v352
          %v631 = vmul.f32 %v624, %v353
          %v632 = vmul.f32 %v624, %v354
          %v633 = vstv %s309
          %v634 = vadd.f32 %v625, %v633
          %v635 = vadd.f32 %v626, %v633
          %v636 = vadd.f32 %v627, %v633
          %v637 = vadd.f32 %v628, %v633
          %v638 = vadd.f32 %v629, %v633
          %v639 = vadd.f32 %v630, %v633
          %v640 = vadd.f32 %v631, %v633
          %v641 = vadd.f32 %v632, %v633
          %v642 = vmax.f32 %v634, 0.0
          %v643 = vmax.f32 %v635, 0.0
          %v644 = vmax.f32 %v636, 0.0
          %v645 = vmax.f32 %v637, 0.0
          %v646 = vmax.f32 %v638, 0.0
          %v647 = vmax.f32 %v639, 0.0
          %v648 = vmax.f32 %v640, 0.0
          %v649 = vmax.f32 %v641, 0.0
          %v650 = vstv %s325
          %v651 = vmul.f32 %v650, %v642
          %v652 = vmul.f32 %v650, %v643
          %v653 = vmul.f32 %v650, %v644
          %v654 = vmul.f32 %v650, %v645
          %v655 = vmul.f32 %v650, %v646
          %v656 = vmul.f32 %v650, %v647
          %v657 = vmul.f32 %v650, %v648
          %v658 = vmul.f32 %v650, %v649
          %v659 = vadd.f32 %v487, %v651
          %v660 = vadd.f32 %v488, %v652
          %v661 = vadd.f32 %v489, %v653
          %v662 = vadd.f32 %v490, %v654
          %v663 = vadd.f32 %v491, %v655
          %v664 = vadd.f32 %v492, %v656
          %v665 = vadd.f32 %v493, %v657
          %v666 = vadd.f32 %v494, %v658
          %v667 = vstv %s294
          %v668 = vmul.f32 %v667, %v347
          %v669 = vmul.f32 %v667, %v348
          %v670 = vmul.f32 %v667, %v349
          %v671 = vmul.f32 %v667, %v350
          %v672 = vmul.f32 %v667, %v351
          %v673 = vmul.f32 %v667, %v352
          %v674 = vmul.f32 %v667, %v353
          %v675 = vmul.f32 %v667, %v354
          %v676 = vstv %s310
          %v677 = vadd.f32 %v668, %v676
          %v678 = vadd.f32 %v669, %v676
          %v679 = vadd.f32 %v670, %v676
          %v680 = vadd.f32 %v671, %v676
          %v681 = vadd.f32 %v672, %v676
          %v682 = vadd.f32 %v673, %v676
          %v683 = vadd.f32 %v674, %v676
          %v684 = vadd.f32 %v675, %v676
          %v685 = vmax.f32 %v677, 0.0
          %v686 = vmax.f32 %v678, 0.0
          %v687 = vmax.f32 %v679, 0.0
          %v688 = vmax.f32 %v680, 0.0
          %v689 = vmax.f32 %v681, 0.0
          %v690 = vmax.f32 %v682, 0.0
          %v691 = vmax.f32 %v683, 0.0
          %v692 = vmax.f32 %v684, 0.0
          %v693 = vstv %s326
          %v694 = vmul.f32 %v693, %v685
          %v695 = vmul.f32 %v693, %v686
          %v696 = vmul.f32 %v693, %v687
          %v697 = vmul.f32 %v693, %v688
          %v698 = vmul.f32 %v693, %v689
          %v699 = vmul.f32 %v693, %v690
          %v700 = vmul.f32 %v693, %v691
          %v701 = vmul.f32 %v693, %v692
          %v702 = vadd.f32 %v530, %v694
          %v703 = vadd.f32 %v531, %v695
          %v704 = vadd.f32 %v532, %v696
          %v705 = vadd.f32 %v533, %v697
          %v706 = vadd.f32 %v534, %v698
          %v707 = vadd.f32 %v535, %v699
          %v708 = vadd.f32 %v536, %v700
          %v709 = vadd.f32 %v537, %v701
          %v710 = vstv %s295
          %v711 = vmul.f32 %v710, %v347
          %v712 = vmul.f32 %v710, %v348
          %v713 = vmul.f32 %v710, %v349
          %v714 = vmul.f32 %v710, %v350
          %v715 = vmul.f32 %v710, %v351
          %v716 = vmul.f32 %v710, %v352
          %v717 = vmul.f32 %v710, %v353
          %v718 = vmul.f32 %v710, %v354
          %v719 = vstv %s311
          %v720 = vadd.f32 %v711, %v719
          %v721 = vadd.f32 %v712, %v719
          %v722 = vadd.f32 %v713, %v719
          %v723 = vadd.f32 %v714, %v719
          %v724 = vadd.f32 %v715, %v719
          %v725 = vadd.f32 %v716, %v719
          %v726 = vadd.f32 %v717, %v719
          %v727 = vadd.f32 %v718, %v719
          %v728 = vmax.f32 %v720, 0.0
          %v729 = vmax.f32 %v721, 0.0
          %v730 = vmax.f32 %v722, 0.0
          %v731 = vmax.f32 %v723, 0.0
          %v732 = vmax.f32 %v724, 0.0
          %v733 = vmax.f32 %v725, 0.0
          %v734 = vmax.f32 %v726, 0.0
          %v735 = vmax.f32 %v727, 0.0
          %v736 = vstv %s327
          %v737 = vmul.f32 %v736, %v728
          %v738 = vmul.f32 %v736, %v729
          %v739 = vmul.f32 %v736, %v730
          %v740 = vmul.f32 %v736, %v731
          %v741 = vmul.f32 %v736, %v732
          %v742 = vmul.f32 %v736, %v733
          %v743 = vmul.f32 %v736, %v734
          %v744 = vmul.f32 %v736, %v735
          %v745 = vadd.f32 %v573, %v737
          %v746 = vadd.f32 %v574, %v738
          %v747 = vadd.f32 %v575, %v739
          %v748 = vadd.f32 %v576, %v740
          %v749 = vadd.f32 %v577, %v741
          %v750 = vadd.f32 %v578, %v742
          %v751 = vadd.f32 %v579, %v743
          %v752 = vadd.f32 %v580, %v744
          %v753 = vstv %s296
          %v754 = vmul.f32 %v753, %v347
          %v755 = vmul.f32 %v753, %v348
          %v756 = vmul.f32 %v753, %v349
          %v757 = vmul.f32 %v753, %v350
          %v758 = vmul.f32 %v753, %v351
          %v759 = vmul.f32 %v753, %v352
          %v760 = vmul.f32 %v753, %v353
          %v761 = vmul.f32 %v753, %v354
          %v762 = vstv %s312
          %v763 = vadd.f32 %v754, %v762
          %v764 = vadd.f32 %v755, %v762
          %v765 = vadd.f32 %v756, %v762
          %v766 = vadd.f32 %v757, %v762
          %v767 = vadd.f32 %v758, %v762
          %v768 = vadd.f32 %v759, %v762
          %v769 = vadd.f32 %v760, %v762
          %v770 = vadd.f32 %v761, %v762
          %v771 = vmax.f32 %v763, 0.0
          %v772 = vmax.f32 %v764, 0.0
          %v773 = vmax.f32 %v765, 0.0
          %v774 = vmax.f32 %v766, 0.0
          %v775 = vmax.f32 %v767, 0.0
          %v776 = vmax.f32 %v768, 0.0
          %v777 = vmax.f32 %v769, 0.0
          %v778 = vmax.f32 %v770, 0.0
          %v779 = vstv %s328
          %v780 = vmul.f32 %v779, %v771
          %v781 = vmul.f32 %v779, %v772
          %v782 = vmul.f32 %v779, %v773
          %v783 = vmul.f32 %v779, %v774
          %v784 = vmul.f32 %v779, %v775
          %v785 = vmul.f32 %v779, %v776
          %v786 = vmul.f32 %v779, %v777
          %v787 = vmul.f32 %v779, %v778
          %v788 = vadd.f32 %v616, %v780
          %v789 = vadd.f32 %v617, %v781
          %v790 = vadd.f32 %v618, %v782
          %v791 = vadd.f32 %v619, %v783
          %v792 = vadd.f32 %v620, %v784
          %v793 = vadd.f32 %v621, %v785
          %v794 = vadd.f32 %v622, %v786
          %v795 = vadd.f32 %v623, %v787
          %v796 = vstv %s297
          %v797 = vmul.f32 %v796, %v347
          %v798 = vmul.f32 %v796, %v348
          %v799 = vmul.f32 %v796, %v349
          %v800 = vmul.f32 %v796, %v350
          %v801 = vmul.f32 %v796, %v351
          %v802 = vmul.f32 %v796, %v352
          %v803 = vmul.f32 %v796, %v353
          %v804 = vmul.f32 %v796, %v354
          %v805 = vstv %s313
          %v806 = vadd.f32 %v797, %v805
          %v807 = vadd.f32 %v798, %v805
          %v808 = vadd.f32 %v799, %v805
          %v809 = vadd.f32 %v800, %v805
          %v810 = vadd.f32 %v801, %v805
          %v811 = vadd.f32 %v802, %v805
          %v812 = vadd.f32 %v803, %v805
          %v813 = vadd.f32 %v804, %v805
          %v814 = vmax.f32 %v806, 0.0
          %v815 = vmax.f32 %v807, 0.0
          %v816 = vmax.f32 %v808, 0.0
          %v817 = vmax.f32 %v809, 0.0
          %v818 = vmax.f32 %v810, 0.0
          %v819 = vmax.f32 %v811, 0.0
          %v820 = vmax.f32 %v812, 0.0
          %v821 = vmax.f32 %v813, 0.0
          %v822 = vstv %s329
          %v823 = vmul.f32 %v822, %v814
          %v824 = vmul.f32 %v822, %v815
          %v825 = vmul.f32 %v822, %v816
          %v826 = vmul.f32 %v822, %v817
          %v827 = vmul.f32 %v822, %v818
          %v828 = vmul.f32 %v822, %v819
          %v829 = vmul.f32 %v822, %v820
          %v830 = vmul.f32 %v822, %v821
          %v831 = vadd.f32 %v659, %v823
          %v832 = vadd.f32 %v660, %v824
          %v833 = vadd.f32 %v661, %v825
          %v834 = vadd.f32 %v662, %v826
          %v835 = vadd.f32 %v663, %v827
          %v836 = vadd.f32 %v664, %v828
          %v837 = vadd.f32 %v665, %v829
          %v838 = vadd.f32 %v666, %v830
          %v839 = vstv %s298
          %v840 = vmul.f32 %v839, %v347
          %v841 = vmul.f32 %v839, %v348
          %v842 = vmul.f32 %v839, %v349
          %v843 = vmul.f32 %v839, %v350
          %v844 = vmul.f32 %v839, %v351
          %v845 = vmul.f32 %v839, %v352
          %v846 = vmul.f32 %v839, %v353
          %v847 = vmul.f32 %v839, %v354
          %v848 = vstv %s314
          %v849 = vadd.f32 %v840, %v848
          %v850 = vadd.f32 %v841, %v848
          %v851 = vadd.f32 %v842, %v848
          %v852 = vadd.f32 %v843, %v848
          %v853 = vadd.f32 %v844, %v848
          %v854 = vadd.f32 %v845, %v848
          %v855 = vadd.f32 %v846, %v848
          %v856 = vadd.f32 %v847, %v848
          %v857 = vmax.f32 %v849, 0.0
          %v858 = vmax.f32 %v850, 0.0
          %v859 = vmax.f32 %v851, 0.0
          %v860 = vmax.f32 %v852, 0.0
          %v861 = vmax.f32 %v853, 0.0
          %v862 = vmax.f32 %v854, 0.0
          %v863 = vmax.f32 %v855, 0.0
          %v864 = vmax.f32 %v856, 0.0
          %v865 = vstv %s330
          %v866 = vmul.f32 %v865, %v857
          %v867 = vmul.f32 %v865, %v858
          %v868 = vmul.f32 %v865, %v859
          %v869 = vmul.f32 %v865, %v860
          %v870 = vmul.f32 %v865, %v861
          %v871 = vmul.f32 %v865, %v862
          %v872 = vmul.f32 %v865, %v863
          %v873 = vmul.f32 %v865, %v864
          %v874 = vadd.f32 %v702, %v866
          %v875 = vadd.f32 %v703, %v867
          %v876 = vadd.f32 %v704, %v868
          %v877 = vadd.f32 %v705, %v869
          %v878 = vadd.f32 %v706, %v870
          %v879 = vadd.f32 %v707, %v871
          %v880 = vadd.f32 %v708, %v872
          %v881 = vadd.f32 %v709, %v873
          %v882 = vstv %s299
          %v883 = vmul.f32 %v882, %v347
          %v884 = vmul.f32 %v882, %v348
          %v885 = vmul.f32 %v882, %v349
          %v886 = vmul.f32 %v882, %v350
          %v887 = vmul.f32 %v882, %v351
          %v888 = vmul.f32 %v882, %v352
          %v889 = vmul.f32 %v882, %v353
          %v890 = vmul.f32 %v882, %v354
          %v891 = vstv %s315
          %v892 = vadd.f32 %v883, %v891
          %v893 = vadd.f32 %v884, %v891
          %v894 = vadd.f32 %v885, %v891
          %v895 = vadd.f32 %v886, %v891
          %v896 = vadd.f32 %v887, %v891
          %v897 = vadd.f32 %v888, %v891
          %v898 = vadd.f32 %v889, %v891
          %v899 = vadd.f32 %v890, %v891
          %v900 = vmax.f32 %v892, 0.0
          %v901 = vmax.f32 %v893, 0.0
          %v902 = vmax.f32 %v894, 0.0
          %v903 = vmax.f32 %v895, 0.0
          %v904 = vmax.f32 %v896, 0.0
          %v905 = vmax.f32 %v897, 0.0
          %v906 = vmax.f32 %v898, 0.0
          %v907 = vmax.f32 %v899, 0.0
          %v908 = vstv %s331
          %v909 = vmul.f32 %v908, %v900
          %v910 = vmul.f32 %v908, %v901
          %v911 = vmul.f32 %v908, %v902
          %v912 = vmul.f32 %v908, %v903
          %v913 = vmul.f32 %v908, %v904
          %v914 = vmul.f32 %v908, %v905
          %v915 = vmul.f32 %v908, %v906
          %v916 = vmul.f32 %v908, %v907
          %v917 = vadd.f32 %v745, %v909
          %v918 = vadd.f32 %v746, %v910
          %v919 = vadd.f32 %v747, %v911
          %v920 = vadd.f32 %v748, %v912
          %v921 = vadd.f32 %v749, %v913
          %v922 = vadd.f32 %v750, %v914
          %v923 = vadd.f32 %v751, %v915
          %v924 = vadd.f32 %v752, %v916
          %v925 = vstv %s300
          %v926 = vmul.f32 %v925, %v347
          %v927 = vmul.f32 %v925, %v348
          %v928 = vmul.f32 %v925, %v349
          %v929 = vmul.f32 %v925, %v350
          %v930 = vmul.f32 %v925, %v351
          %v931 = vmul.f32 %v925, %v352
          %v932 = vmul.f32 %v925, %v353
          %v933 = vmul.f32 %v925, %v354
          %v934 = vstv %s316
          %v935 = vadd.f32 %v926, %v934
          %v936 = vadd.f32 %v927, %v934
          %v937 = vadd.f32 %v928, %v934
          %v938 = vadd.f32 %v929, %v934
          %v939 = vadd.f32 %v930, %v934
          %v940 = vadd.f32 %v931, %v934
          %v941 = vadd.f32 %v932, %v934
          %v942 = vadd.f32 %v933, %v934
          %v943 = vmax.f32 %v935, 0.0
          %v944 = vmax.f32 %v936, 0.0
          %v945 = vmax.f32 %v937, 0.0
          %v946 = vmax.f32 %v938, 0.0
          %v947 = vmax.f32 %v939, 0.0
          %v948 = vmax.f32 %v940, 0.0
          %v949 = vmax.f32 %v941, 0.0
          %v950 = vmax.f32 %v942, 0.0
          %v951 = vstv %s332
          %v952 = vmul.f32 %v951, %v943
          %v953 = vmul.f32 %v951, %v944
          %v954 = vmul.f32 %v951, %v945
          %v955 = vmul.f32 %v951, %v946
          %v956 = vmul.f32 %v951, %v947
          %v957 = vmul.f32 %v951, %v948
          %v958 = vmul.f32 %v951, %v949
          %v959 = vmul.f32 %v951, %v950
          %v960 = vadd.f32 %v788, %v952
          %v961 = vadd.f32 %v789, %v953
          %v962 = vadd.f32 %v790, %v954
          %v963 = vadd.f32 %v791, %v955
          %v964 = vadd.f32 %v792, %v956
          %v965 = vadd.f32 %v793, %v957
          %v966 = vadd.f32 %v794, %v958
          %v967 = vadd.f32 %v795, %v959
          %v968 = vstv %s301
          %v969 = vmul.f32 %v968, %v347
          %v970 = vmul.f32 %v968, %v348
          %v971 = vmul.f32 %v968, %v349
          %v972 = vmul.f32 %v968, %v350
          %v973 = vmul.f32 %v968, %v351
          %v974 = vmul.f32 %v968, %v352
          %v975 = vmul.f32 %v968, %v353
          %v976 = vmul.f32 %v968, %v354
          %v977 = vstv %s317
          %v978 = vadd.f32 %v969, %v977
          %v979 = vadd.f32 %v970, %v977
          %v980 = vadd.f32 %v971, %v977
          %v981 = vadd.f32 %v972, %v977
          %v982 = vadd.f32 %v973, %v977
          %v983 = vadd.f32 %v974, %v977
          %v984 = vadd.f32 %v975, %v977
          %v985 = vadd.f32 %v976, %v977
          %v986 = vmax.f32 %v978, 0.0
          %v987 = vmax.f32 %v979, 0.0
          %v988 = vmax.f32 %v980, 0.0
          %v989 = vmax.f32 %v981, 0.0
          %v990 = vmax.f32 %v982, 0.0
          %v991 = vmax.f32 %v983, 0.0
          %v992 = vmax.f32 %v984, 0.0
          %v993 = vmax.f32 %v985, 0.0
          %v994 = vstv %s333
          %v995 = vmul.f32 %v994, %v986
          %v996 = vmul.f32 %v994, %v987
          %v997 = vmul.f32 %v994, %v988
          %v998 = vmul.f32 %v994, %v989
          %v999 = vmul.f32 %v994, %v990
          %v1000 = vmul.f32 %v994, %v991
          %v1001 = vmul.f32 %v994, %v992
          %v1002 = vmul.f32 %v994, %v993
          %v1003 = vadd.f32 %v831, %v995
          %v1004 = vadd.f32 %v832, %v996
          %v1005 = vadd.f32 %v833, %v997
          %v1006 = vadd.f32 %v834, %v998
          %v1007 = vadd.f32 %v835, %v999
          %v1008 = vadd.f32 %v836, %v1000
          %v1009 = vadd.f32 %v837, %v1001
          %v1010 = vadd.f32 %v838, %v1002
          %v1011 = vadd.f32 %v874, %v917
          %v1012 = vadd.f32 %v875, %v918
          %v1013 = vadd.f32 %v876, %v919
          %v1014 = vadd.f32 %v877, %v920
          %v1015 = vadd.f32 %v878, %v921
          %v1016 = vadd.f32 %v879, %v922
          %v1017 = vadd.f32 %v880, %v923
          %v1018 = vadd.f32 %v881, %v924
          %v1019 = vadd.f32 %v960, %v1003
          %v1020 = vadd.f32 %v961, %v1004
          %v1021 = vadd.f32 %v962, %v1005
          %v1022 = vadd.f32 %v963, %v1006
          %v1023 = vadd.f32 %v964, %v1007
          %v1024 = vadd.f32 %v965, %v1008
          %v1025 = vadd.f32 %v966, %v1009
          %v1026 = vadd.f32 %v967, %v1010
          %v1027 = vadd.f32 %v1011, %v1019
          %v1028 = vadd.f32 %v1012, %v1020
          %v1029 = vadd.f32 %v1013, %v1021
          %v1030 = vadd.f32 %v1014, %v1022
          %v1031 = vadd.f32 %v1015, %v1023
          %v1032 = vadd.f32 %v1016, %v1024
          %v1033 = vadd.f32 %v1017, %v1025
          %v1034 = vadd.f32 %v1018, %v1026
          %v1035 = vstv %s334
          %v1036 = vadd.f32 %v1027, %v1035
          %v1037 = vadd.f32 %v1028, %v1035
          %v1038 = vadd.f32 %v1029, %v1035
          %v1039 = vadd.f32 %v1030, %v1035
          %v1040 = vadd.f32 %v1031, %v1035
          %v1041 = vadd.f32 %v1032, %v1035
          %v1042 = vadd.f32 %v1033, %v1035
          %v1043 = vadd.f32 %v1034, %v1035
          %v1044 = vmul.f32 %v1036, 1.442695
          %v1045 = vpow.pop %v1044
          %v1046 = vmul.f32 %v1037, 1.442695
          %v1047 = vpow.pop %v1046
          %v1048 = vmul.f32 %v1038, 1.442695
          %v1049 = vpow.pop %v1048
          %v1050 = vmul.f32 %v1039, 1.442695
          %v1051 = vpow.pop %v1050
          %v1052 = vmul.f32 %v1040, 1.442695
          %v1053 = vpow.pop %v1052
          %v1054 = vmul.f32 %v1041, 1.442695
          %v1055 = vpow.pop %v1054
          %v1056 = vmul.f32 %v1042, 1.442695
          %v1057 = vpow.pop %v1056
          %v1058 = vmul.f32 %v1043, 1.442695
          %v1059 = vpow.pop %v1058
          %v1060 = vadd.f32 %v1045, 1.0
          %v1061 = vadd.f32 %v1047, 1.0
          %v1062 = vadd.f32 %v1049, 1.0
          %v1063 = vadd.f32 %v1051, 1.0
          %v1064 = vadd.f32 %v1053, 1.0
          %v1065 = vadd.f32 %v1055, 1.0
          %v1066 = vadd.f32 %v1057, 1.0
          %v1067 = vadd.f32 %v1059, 1.0
          %v1068 = vrcp.pop %v1060
          %v1069 = vrcp.pop %v1061
          %v1070 = vrcp.pop %v1062
          %v1071 = vrcp.pop %v1063
          %v1072 = vrcp.pop %v1064
          %v1073 = vrcp.pop %v1065
          %v1074 = vrcp.pop %v1066
          %v1075 = vrcp.pop %v1067
          %s1076 = smul.addr %s344, 8
          %s1077 = scalar_lea.vmem %s283, %s1076 [#allocation11]
          %1078 = vst [vmem:[%s1077] sm:$0xff] %v1068
          %1079 = vst [vmem:[%s1077 + $0x8] sm:$0xff] %v1069
          %1080 = vst [vmem:[%s1077 + $0x10] sm:$0xff] %v1070
          %1081 = vst [vmem:[%s1077 + $0x18] sm:$0xff] %v1071
          %1082 = vst [vmem:[%s1077 + $0x20] sm:$0xff] %v1072
          %1083 = vst [vmem:[%s1077 + $0x28] sm:$0xff] %v1073
          %1084 = vst [vmem:[%s1077 + $0x30] sm:$0xff] %v1074
          %1085 = vst [vmem:[%s1077 + $0x38] sm:$0xff] %v1075
        $region61: #{tpu_custom_call.1} parent=39 // loop_footer
          %s340 = sadd.s32 1, %s336
        $region62: #{tpu_custom_call.1} parent=39 // loop_footer_branch
          %335 = sbr.rel target = $region58
        $region63: #{tpu_custom_call.1} parent=39 // loop_exit
          _
        %s1086 = sand.u32 %s143, 1
        %s1087 = scalar_lea.sflag [#allocation5], %s1086
        %s1088 = sand.u32 %s143, 1
        %s1089 = smul.addr %s1088, 128
        %s1090 = scalar_lea.vmem [#allocation11], %s1089
        // Predicated region
        $region64: #{tpu_custom_call.1} parent=39 // pred_check
          %p1091 = pneg %p153
        $region65: #{tpu_custom_call.1} parent=39 // pred_check_branch
          %1093 = sbr.rel (%p1091) target = $region67
        $region66: #{tpu_custom_call.1} parent=39 // pred_region
          %s1094 = smul.u32 2, %s25
          %s1096 = ssub.s32 2048, 2048
          %1097 = vsyncadd %s1087, %s1096
          %s1098 = smul.addr %s1094, 8
          %s1099 = smul.addr %s1098, 128
          %s1100 = scalar_lea.hbm %s5, %s1099
          %s1101 = sshll.u32 %s1090, 4
          %s1102 = int_to_ptr.vmem [resolvable:$true] %s1101
          %1107 = dma.vmem_to_hbm [thread:$0]  %s1102, 2048, %s1100, %s1087, 1024, 1024, 64
        $region67: #{tpu_custom_call.1} parent=39 // pred_fallthru
          _
      $region40: #{tpu_custom_call.1} parent=5 // pred_fallthru
        _
      %p1108 = scmp.le.s32.totalorder 2, %s20
      // Predicated region
      $region68: #{tpu_custom_call.1} parent=5 // pred_check
        %p1109 = pneg %p1108
      $region69: #{tpu_custom_call.1} parent=5 // pred_check_branch
        %1111 = sbr.rel (%p1109) target = $region71
      $region70: #{tpu_custom_call.1} parent=5 // pred_region
        %s1112 = ssub.s32 %s20, 2
        // Predicated region
        $region72: #{tpu_custom_call.1} parent=70 // pred_check
          %p1113 = pneg %p159
        $region73: #{tpu_custom_call.1} parent=70 // pred_check_branch
          %1115 = sbr.rel (%p1113) target = $region75
        $region74: #{tpu_custom_call.1} parent=70 // pred_region
          %s1116 = sand.u32 %s144, 1
          %s1117 = scalar_lea.sflag [#allocation5], %s1116
          %s1118 = sand.u32 %s144, 1
          %s1119 = smul.addr %s1118, 128
          %s1120 = scalar_lea.vmem [#allocation11], %s1119
          %1121 = dma.done %s1117, 2048
        $region75: #{tpu_custom_call.1} parent=70 // pred_fallthru
          _
      $region71: #{tpu_custom_call.1} parent=5 // pred_fallthru
        _
    $region6: #{tpu_custom_call.1} parent=1 // loop_footer
      %s24 = sadd.s32 1, %s20
    $region7: #{tpu_custom_call.1} parent=1 // loop_footer_branch
      %19 = sbr.rel target = $region3
    $region8: #{tpu_custom_call.1} parent=1 // loop_exit
      _
    %1122 = vsyncpa [#allocation4], 1
    %s1123 = scalar_lea.sflag [#allocation4], 1
    %1124 = vsyncpa %s1123, 1
    %1125 = vsyncpa [#allocation5], 1
    %s1126 = scalar_lea.sflag [#allocation5], 1
    %1127 = vsyncpa %s1126, 1
    %1128 = vsyncpa [#allocation6], 1
    %s1129 = scalar_lea.sflag [#allocation6], 1
    %1130 = vsyncpa %s1129, 1
    %1131 = vsyncpa [#allocation8], 1

</llo_original>
